<compile_context>
chip_gen: v7x
topology: tpu7x:2x2x1
jax: 0.10.0
libtpu: 0.0.40
codegen_flags: <defaults>
</compile_context>

<pallas_src>
import functools
import math

import jax
import jax.numpy as jnp
from jax.experimental import pallas as pl
from jax.experimental.pallas import tpu as pltpu

_LANE = 128     # lane width: final output dim padded to a multiple of this
_SUBLANE = 8    # sublane width (f32): batch tile multiple


def _round_up(n, m):
    return ((n + m - 1) // m) * m


def _vmem_capacity_bytes():
    """Best-effort VMEM capacity query; conservative 64 MiB (v7x) fallback."""
    try:
        return int(pltpu.get_tpu_info().vmem_capacity_bytes)
    except Exception:
        return 64 << 20


def _mlp_kernel(*refs, num_layers):
    """Fused MLP body.

    refs = (x_ref, w0_ref, b0_ref, ..., w{L-1}_ref, b{L-1}_ref, o_ref).
    ReLU after every layer except the last (matches `net.forward`).  Only the
    last layer's fan_out is zero-padded (lane-dense output); padded columns
    carry exact zeros, so results are numerically exact.
    """
    x_ref = refs[0]
    o_ref = refs[1 + 2 * num_layers]
    y = x_ref[...]
    for l in range(num_layers):
        w = refs[1 + 2 * l][...]
        b = refs[2 + 2 * l][...]
        if y.dtype != w.dtype:
            # bf16-weight mode: matched bf16 operands feed the bf16 MXU path;
            # accumulation stays f32 via preferred_element_type.
            y = y.astype(w.dtype)
        y = jnp.dot(y, w, preferred_element_type=jnp.float32)
        y = y + b                       # bias kept in f32
        if l < num_layers - 1:
            y = jnp.maximum(y, 0.0)
    o_ref[...] = y.astype(o_ref.dtype)


def prepare_params(params, weights_dtype=jnp.float32):
    """Pad/cast parameters ONCE (hoisted out of the per-call forward path).

    params: list of (w:(fan_in, fan_out), b:(1, fan_out)) with weights stored
    transposed so y = x @ w + b.  Only the last layer's fan_out (and bias) is
    zero-padded to a multiple of 128; interior dims stay unpadded since the
    intermediates never leave VMEM.  Biases stay f32 even in bf16-weight mode.
    """
    num_layers = len(params)
    prepared = []
    for l, (w, b) in enumerate(params):
        if l == num_layers - 1:
            fo = w.shape[1]
            fo_p = _round_up(fo, _LANE)
            if fo_p != fo:
                w = jnp.pad(w, ((0, 0), (0, fo_p - fo)))
                b = jnp.pad(b, ((0, 0), (0, fo_p - fo)))
        prepared.append((jnp.asarray(w, weights_dtype),
                         jnp.asarray(b, jnp.float32)))
    return prepared


def net_forward(x, prepared_params, *, out_features=None, batch_tile=512,
                trim_output=True):
    """Forward pass of `net` as one fused Pallas kernel.

    x: (B, Fin) f32.  prepared_params: output of prepare_params().
    Returns (B, out_features) when trim_output and out_features are given,
    otherwise the row/lane-padded buffer (lane-dense for downstream kernels).
    """
    B, Fin = x.shape
    num_layers = len(prepared_params)
    assert prepared_params[0][0].shape[0] == Fin, "fan_in mismatch with x"
    Fout_p = prepared_params[-1][0].shape[1]

    # ---- batch tiling (only padding that can happen per-call) -------------
    if B >= batch_tile:
        B_p = _round_up(B, batch_tile)
        tb = batch_tile
    else:
        B_p = _round_up(B, _SUBLANE)
        tb = B_p
    if B_p != B:
        x = jnp.pad(x, ((0, B_p - B), (0, 0)))

    # ---- BlockSpecs --------------------------------------------------------
    # x: batch-tiled; feature dim equals the full array dim (no lane padding).
    in_specs = [pl.BlockSpec((tb, Fin), lambda i: (i, 0))]
    flat_params = []
    for (w, b) in prepared_params:
        fi, fo = w.shape
        flat_params += [w, b]
        in_specs += [
            pl.BlockSpec((fi, fo), lambda i: (0, 0)),   # whole weight, resident
            pl.BlockSpec((1, fo), lambda i: (0, 0)),    # whole bias, resident
        ]

    # ---- VMEM guard (all weights resident + default double-buffering) -----
    nbytes = lambda a: a.size * a.dtype.itemsize
    weight_bytes = sum(nbytes(w) + nbytes(b) for w, b in prepared_params)
    io_bytes = (tb * Fin + tb * Fout_p) * x.dtype.itemsize
    est = 2 * (weight_bytes + io_bytes)          # 2x: double-buffered pipeline
    vmem_cap = _vmem_capacity_bytes()
    if est > (vmem_cap * 3) // 4:
        # TODO(synk): per-layer K/N tiling (emit_pipeline / extra grid axis)
        # fallback for hidden dims too large to keep fully resident.
        raise ValueError(
            f"Fused MLP needs ~{est >> 20} MiB VMEM (incl. double buffering), "
            f"which exceeds this chip's capacity ({vmem_cap >> 20} MiB); "
            "use per-layer tiling instead of the fully fused kernel.")
    compiler_kwargs = {}
    if est > (24 << 20):   # above the default scoped VMEM limit -> raise it
        compiler_kwargs["vmem_limit_bytes"] = min(int(est * 1.25),
                                                  (vmem_cap * 7) // 8)

    kernel = functools.partial(_mlp_kernel, num_layers=num_layers)
    out_p = pl.pallas_call(
        kernel,
        out_shape=jax.ShapeDtypeStruct((B_p, Fout_p), x.dtype),
        grid=(B_p // tb,),
        in_specs=in_specs,
        out_specs=pl.BlockSpec((tb, Fout_p), lambda i: (i, 0)),
        compiler_params=pltpu.CompilerParams(
            # Batch tiles are independent: shards across TCs where supported;
            # harmless on single-TC v5e/v6e.
            dimension_semantics=("parallel",),
            **compiler_kwargs,
        ),
    )(x, *flat_params)

    if not trim_output:
        return out_p
    if out_features is None:
        return out_p[:B]                    # rows only, stay lane-dense
    return out_p[:B, :out_features]


def init_mlp_params(key, in_features, hidden_layers_dims, out_features):
    """Replicates net.__init__ layer-shape logic: dims = [in, *hidden, out].
    torch.nn.Linear default U(-1/sqrt(fan_in), 1/sqrt(fan_in)) init.
    Weights stored transposed to (fan_in, fan_out) so y = x @ w + b."""
    dims = [int(in_features)] + list(hidden_layers_dims) + [int(out_features)]
    params = []
    for i in range(len(dims) - 1):
        fan_in, fan_out = dims[i], dims[i + 1]
        key, kw, kb = jax.random.split(key, 3)
        bound = 1.0 / math.sqrt(fan_in)
        w = jax.random.uniform(kw, (fan_in, fan_out), jnp.float32, -bound, bound)
        b = jax.random.uniform(kb, (1, fan_out), jnp.float32, -bound, bound)
        params.append((w, b))
    return params


# TODO(synk): MSELoss / Adam optimizer / save / load from the PyTorch module
# are training & IO machinery, not part of the forward pass; not translated.

if __name__ == "__main__":
    key = jax.random.PRNGKey(0)
    kx, kp = jax.random.split(key)

    batch = 8
    in_features = 32
    hidden_layers_dims = [64, 64]
    out_features = 16

    x = jax.random.normal(kx, (batch, in_features), jnp.float32)
    params = init_mlp_params(kp, in_features, hidden_layers_dims, out_features)

    # Pad/cast the parameters ONCE (hoisted out of the forward path).
    prepared_f32 = prepare_params(params)

    fwd = jax.jit(net_forward,
                  static_argnames=("out_features", "batch_tile", "trim_output"))
    y = fwd(x, prepared_f32, out_features=out_features)
    jax.block_until_ready(y)

    # Plain-JAX f32 reference of the same MLP.
    ref = x
    for i, (w, b) in enumerate(params):
        ref = ref @ w + b
        if i < len(params) - 1:
            ref = jnp.maximum(ref, 0.0)

    assert y.shape == (batch, out_features)
    assert jnp.allclose(y, ref, atol=1e-5, rtol=1e-5)

    # Optional bf16-weight path (halves weight DMA bytes, bf16 MXU); f32 accum.
    prepared_bf16 = prepare_params(params, weights_dtype=jnp.bfloat16)
    y_bf16 = fwd(x, prepared_bf16, out_features=out_features)
    jax.block_until_ready(y_bf16)
    assert y_bf16.shape == (batch, out_features)
    assert jnp.allclose(y_bf16, ref, atol=5e-2, rtol=5e-2)

    print("KERNEL_OK")
</pallas_src>

<mosaic_0001>
module attributes {stable_mosaic.version = 11 : i64} {
  func.func @_mlp_kernel(%arg0: i32, %arg1: memref<8x32xf32, #tpu.memory_space<vmem>>, %arg2: memref<32x64xf32, #tpu.memory_space<vmem>>, %arg3: memref<1x64xf32, #tpu.memory_space<vmem>>, %arg4: memref<64x64xf32, #tpu.memory_space<vmem>>, %arg5: memref<1x64xf32, #tpu.memory_space<vmem>>, %arg6: memref<64x128xf32, #tpu.memory_space<vmem>>, %arg7: memref<1x128xf32, #tpu.memory_space<vmem>>, %arg8: memref<8x128xf32, #tpu.memory_space<vmem>>) attributes {dimension_semantics = [#tpu.dimension_semantics<parallel>], iteration_bounds = array<i64: 1>, scalar_prefetch = 0 : i64, scratch_operands = 0 : i64, tpu.core_type = #tpu.core_type<tc>, window_params = [{transform_indices = @transform_0, window_bounds = array<i64: 8, 32>}, {pipeline_mode = #tpu.pipeline_mode<synchronous>, transform_indices = @transform_1, window_bounds = array<i64: 32, 64>}, {pipeline_mode = #tpu.pipeline_mode<synchronous>, transform_indices = @transform_2, window_bounds = array<i64: 1, 64>}, {pipeline_mode = #tpu.pipeline_mode<synchronous>, transform_indices = @transform_3, window_bounds = array<i64: 64, 64>}, {pipeline_mode = #tpu.pipeline_mode<synchronous>, transform_indices = @transform_4, window_bounds = array<i64: 1, 64>}, {pipeline_mode = #tpu.pipeline_mode<synchronous>, transform_indices = @transform_5, window_bounds = array<i64: 64, 128>}, {pipeline_mode = #tpu.pipeline_mode<synchronous>, transform_indices = @transform_6, window_bounds = array<i64: 1, 128>}, {transform_indices = @transform_7, window_bounds = array<i64: 8, 128>}]} {
    %c0 = arith.constant 0 : index
    %c0_0 = arith.constant 0 : index
    %0 = vector.load %arg1[%c0, %c0_0] : memref<8x32xf32, #tpu.memory_space<vmem>>, vector<8x32xf32>
    %c0_1 = arith.constant 0 : index
    %c0_2 = arith.constant 0 : index
    %1 = vector.load %arg2[%c0_1, %c0_2] : memref<32x64xf32, #tpu.memory_space<vmem>>, vector<32x64xf32>
    %c0_3 = arith.constant 0 : index
    %c0_4 = arith.constant 0 : index
    %2 = vector.load %arg3[%c0_3, %c0_4] : memref<1x64xf32, #tpu.memory_space<vmem>>, vector<1x64xf32>
    %cst = arith.constant dense<0.000000e+00> : vector<8x64xf32>
    %3 = tpu.matmul %0, %1, %cst {dimension_numbers = #tpu.dot_dimension_numbers<[1], [0], [0], [1], [0, 0, 1, 1], [], []>} : vector<8x32xf32>, vector<32x64xf32>, vector<8x64xf32> -> vector<8x64xf32>
    %4 = vector.broadcast %2 : vector<1x64xf32> to vector<8x64xf32>
    %5 = arith.addf %3, %4 : vector<8x64xf32>
    %cst_5 = arith.constant 0.000000e+00 : f32
    %6 = vector.broadcast %cst_5 : f32 to vector<8x64xf32>
    %7 = arith.maximumf %5, %6 : vector<8x64xf32>
    %c0_6 = arith.constant 0 : index
    %c0_7 = arith.constant 0 : index
    %8 = vector.load %arg4[%c0_6, %c0_7] : memref<64x64xf32, #tpu.memory_space<vmem>>, vector<64x64xf32>
    %c0_8 = arith.constant 0 : index
    %c0_9 = arith.constant 0 : index
    %9 = vector.load %arg5[%c0_8, %c0_9] : memref<1x64xf32, #tpu.memory_space<vmem>>, vector<1x64xf32>
    %cst_10 = arith.constant dense<0.000000e+00> : vector<8x64xf32>
    %10 = tpu.matmul %7, %8, %cst_10 {dimension_numbers = #tpu.dot_dimension_numbers<[1], [0], [0], [1], [0, 0, 1, 1], [], []>} : vector<8x64xf32>, vector<64x64xf32>, vector<8x64xf32> -> vector<8x64xf32>
    %11 = vector.broadcast %9 : vector<1x64xf32> to vector<8x64xf32>
    %12 = arith.addf %10, %11 : vector<8x64xf32>
    %cst_11 = arith.constant 0.000000e+00 : f32
    %13 = vector.broadcast %cst_11 : f32 to vector<8x64xf32>
    %14 = arith.maximumf %12, %13 : vector<8x64xf32>
    %c0_12 = arith.constant 0 : index
    %c0_13 = arith.constant 0 : index
    %15 = vector.load %arg6[%c0_12, %c0_13] : memref<64x128xf32, #tpu.memory_space<vmem>>, vector<64x128xf32>
    %c0_14 = arith.constant 0 : index
    %c0_15 = arith.constant 0 : index
    %16 = vector.load %arg7[%c0_14, %c0_15] : memref<1x128xf32, #tpu.memory_space<vmem>>, vector<1x128xf32>
    %cst_16 = arith.constant dense<0.000000e+00> : vector<8x128xf32>
    %17 = tpu.matmul %14, %15, %cst_16 {dimension_numbers = #tpu.dot_dimension_numbers<[1], [0], [0], [1], [0, 0, 1, 1], [], []>} : vector<8x64xf32>, vector<64x128xf32>, vector<8x128xf32> -> vector<8x128xf32>
    %18 = vector.broadcast %16 : vector<1x128xf32> to vector<8x128xf32>
    %19 = arith.addf %17, %18 : vector<8x128xf32>
    %c0_17 = arith.constant 0 : index
    %c0_18 = arith.constant 0 : index
    %20 = vector.load %arg8[%c0_17, %c0_18] : memref<8x128xf32, #tpu.memory_space<vmem>>, vector<8x128xf32>
    tpu.vector_store %arg8[%c0_17, %c0_18], %19 {strides = array<i32>} : memref<8x128xf32, #tpu.memory_space<vmem>>, vector<8x128xf32>,
    return
  }
  func.func @transform_0(%arg0: i32) -> (i32, i32) {
    %c0_i32 = arith.constant 0 : i32
    %c0_i32_0 = arith.constant 0 : i32
    return %arg0, %c0_i32 : i32, i32
  }
  func.func @transform_1(%arg0: i32) -> (i32, i32) {
    %c0_i32 = arith.constant 0 : i32
    %c0_i32_0 = arith.constant 0 : i32
    %c0_i32_1 = arith.constant 0 : i32
    return %c0_i32, %c0_i32_0 : i32, i32
  }
  func.func @transform_2(%arg0: i32) -> (i32, i32) {
    %c0_i32 = arith.constant 0 : i32
    %c0_i32_0 = arith.constant 0 : i32
    %c0_i32_1 = arith.constant 0 : i32
    return %c0_i32, %c0_i32_0 : i32, i32
  }
  func.func @transform_3(%arg0: i32) -> (i32, i32) {
    %c0_i32 = arith.constant 0 : i32
    %c0_i32_0 = arith.constant 0 : i32
    %c0_i32_1 = arith.constant 0 : i32
    return %c0_i32, %c0_i32_0 : i32, i32
  }
  func.func @transform_4(%arg0: i32) -> (i32, i32) {
    %c0_i32 = arith.constant 0 : i32
    %c0_i32_0 = arith.constant 0 : i32
    %c0_i32_1 = arith.constant 0 : i32
    return %c0_i32, %c0_i32_0 : i32, i32
  }
  func.func @transform_5(%arg0: i32) -> (i32, i32) {
    %c0_i32 = arith.constant 0 : i32
    %c0_i32_0 = arith.constant 0 : i32
    %c0_i32_1 = arith.constant 0 : i32
    return %c0_i32, %c0_i32_0 : i32, i32
  }
  func.func @transform_6(%arg0: i32) -> (i32, i32) {
    %c0_i32 = arith.constant 0 : i32
    %c0_i32_0 = arith.constant 0 : i32
    %c0_i32_1 = arith.constant 0 : i32
    return %c0_i32, %c0_i32_0 : i32, i32
  }
  func.func @transform_7(%arg0: i32) -> (i32, i32) {
    %c0_i32 = arith.constant 0 : i32
    %c0_i32_0 = arith.constant 0 : i32
    return %arg0, %c0_i32 : i32, i32
  }
}

</mosaic_0001>

<llo_original>
// kernel: net_forward.1
$region0: #{net_forward.1}
  #allocation0 [shape = 'u32[]', space=smem, size = 0x4, offset = 0x4, fixed_abs, tag = 'smem constant byte address 0x4 - core index']
  #allocation1 [shape = 'u32[144,128]{1,0:T(1,128)}', space=vmem, size = 0x12000, scoped, tag = 'internal scratch']
  %s0 = inlined_call_operand.hbm [shape: f32[8,32], index: 0, kind: input, shape index: {}]
  %s1 = inlined_call_operand.hbm [shape: f32[32,64], index: 1, kind: input, shape index: {}]
  %s2 = inlined_call_operand.vmem [shape: f32[1,64], index: 2, kind: input, shape index: {}]
  %s3 = inlined_call_operand.hbm [shape: f32[64,64], index: 3, kind: input, shape index: {}]
  %s4 = inlined_call_operand.vmem [shape: f32[1,64], index: 4, kind: input, shape index: {}]
  %s5 = inlined_call_operand.hbm [shape: f32[64,128], index: 5, kind: input, shape index: {}]
  %s6 = inlined_call_operand.vmem [shape: f32[1,128], index: 6, kind: input, shape index: {}]
  %s7 = inlined_call_operand.hbm [shape: f32[8,128], index: 7, kind: output, shape index: {}]
  %s8 = sld [smem:[#allocation0]]
  $region54: #{net_forward.1} parent=0
    _
  %s10 = ssub.s32 1, %s8
  %s11 = scalar_select 0, %s10, %s8
  $region1: #{net_forward.1} parent=0
    #allocation2 [shape = 'u8[4096]{0}', space=vmem, size = 0x1000, scoped, tag = 'input window, operand 0, single buffered']
    #allocation3 [shape = 's32[1]{0}', space=sflag, size = 0x4, scoped, tag = 'scoped memory for net_forward.1']
    #allocation4 [shape = 's32[1]{0}', space=sflag, size = 0x4, scoped, tag = 'scoped memory for net_forward.1']
    #allocation5 [shape = 'u8[16384]{0}', space=vmem, size = 0x4000, scoped, tag = 'input window, operand 1, single buffered']
    #allocation6 [shape = 's32[1]{0}', space=sflag, size = 0x4, scoped, tag = 'scoped memory for net_forward.1']
    #allocation7 [shape = 'u8[32768]{0}', space=vmem, size = 0x8000, scoped, tag = 'input window, operand 3, single buffered']
    #allocation8 [shape = 'u8[32768]{0}', space=vmem, size = 0x8000, scoped, tag = 'input window, operand 5, single buffered']
    #allocation9 [shape = 's32[1]{0}', space=sflag, size = 0x4, scoped, tag = 'scoped memory for net_forward.1']
    #allocation10 [shape = 'u8[4096]{0}', space=vmem, size = 0x1000, scoped, tag = 'output window, operand 0, single buffered']
    %12 = vsyncpa [#allocation3], 0
    %13 = vsyncpa [#allocation6], 0
    %14 = vsyncpa [#allocation9], 0
    %15 = vsyncpa [#allocation4], 0
    // Predicated region
    $region2: #{net_forward.1} parent=1 // pred_check
      _
    $region3: #{net_forward.1} parent=1 // pred_check_branch
      %17 = sbr.rel (0) target = $region5
    $region4: #{net_forward.1} parent=1 // pred_region
      %s19 = ssub.s32 128, 128
      %20 = vsyncadd [#allocation3], %s19
      %s22 = sshll.u32 [#allocation2], 4
      %s23 = int_to_ptr.vmem [resolvable:$true] %s22
      %25 = dma.hbm_to_vmem [thread:$0]  %s0, 128, %s23, [#allocation3]
    $region5: #{net_forward.1} parent=1 // pred_fallthru
      _
    // Predicated region
    $region6: #{net_forward.1} parent=1 // pred_check
      _
    $region7: #{net_forward.1} parent=1 // pred_check_branch
      %27 = sbr.rel (0) target = $region9
    $region8: #{net_forward.1} parent=1 // pred_region
      %s29 = ssub.s32 512, 512
      %30 = vsyncadd [#allocation6], %s29
      %s31 = sshll.u32 [#allocation5], 4
      %s32 = int_to_ptr.vmem [resolvable:$true] %s31
      %37 = dma.hbm_to_vmem [thread:$0]  %s1, 512, %s32, [#allocation6], 128, 128, 8
    $region9: #{net_forward.1} parent=1 // pred_fallthru
      _
    // Predicated region
    $region10: #{net_forward.1} parent=1 // pred_check
      _
    $region11: #{net_forward.1} parent=1 // pred_check_branch
      %39 = sbr.rel (0) target = $region13
    $region12: #{net_forward.1} parent=1 // pred_region
      _
    $region13: #{net_forward.1} parent=1 // pred_fallthru
      _
    // Predicated region
    $region14: #{net_forward.1} parent=1 // pred_check
      _
    $region15: #{net_forward.1} parent=1 // pred_check_branch
      %41 = sbr.rel (0) target = $region17
    $region16: #{net_forward.1} parent=1 // pred_region
      %s43 = ssub.s32 1024, 1024
      %44 = vsyncadd [#allocation6], %s43
      %s45 = sshll.u32 [#allocation7], 4
      %s46 = int_to_ptr.vmem [resolvable:$true] %s45
      %51 = dma.hbm_to_vmem [thread:$0]  %s3, 1024, %s46, [#allocation6], 128, 128, 8
    $region17: #{net_forward.1} parent=1 // pred_fallthru
      _
    // Predicated region
    $region18: #{net_forward.1} parent=1 // pred_check
      _
    $region19: #{net_forward.1} parent=1 // pred_check_branch
      %53 = sbr.rel (0) target = $region21
    $region20: #{net_forward.1} parent=1 // pred_region
      _
    $region21: #{net_forward.1} parent=1 // pred_fallthru
      _
    // Predicated region
    $region22: #{net_forward.1} parent=1 // pred_check
      _
    $region23: #{net_forward.1} parent=1 // pred_check_branch
      %55 = sbr.rel (0) target = $region25
    $region24: #{net_forward.1} parent=1 // pred_region
      %s57 = ssub.s32 1024, 1024
      %58 = vsyncadd [#allocation9], %s57
      %s59 = sshll.u32 [#allocation8], 4
      %s60 = int_to_ptr.vmem [resolvable:$true] %s59
      %65 = dma.hbm_to_vmem [thread:$0]  %s5, 1024, %s60, [#allocation9], 128, 128, 8
    $region25: #{net_forward.1} parent=1 // pred_fallthru
      _
    // Predicated region
    $region26: #{net_forward.1} parent=1 // pred_check
      _
    $region27: #{net_forward.1} parent=1 // pred_check_branch
      %67 = sbr.rel (0) target = $region29
    $region28: #{net_forward.1} parent=1 // pred_region
      _
    $region29: #{net_forward.1} parent=1 // pred_fallthru
      _
    // Predicated region
    $region30: #{net_forward.1} parent=1 // pred_check
      _
    $region31: #{net_forward.1} parent=1 // pred_check_branch
      %69 = sbr.rel (0) target = $region33
    $region32: #{net_forward.1} parent=1 // pred_region
      %70 = dma.done [#allocation3], 128
    $region33: #{net_forward.1} parent=1 // pred_fallthru
      _
    // Predicated region
    $region34: #{net_forward.1} parent=1 // pred_check
      _
    $region35: #{net_forward.1} parent=1 // pred_check_branch
      %72 = sbr.rel (0) target = $region37
    $region36: #{net_forward.1} parent=1 // pred_region
      %73 = dma.done [#allocation6], 512
    $region37: #{net_forward.1} parent=1 // pred_fallthru
      _
    // Predicated region
    $region38: #{net_forward.1} parent=1 // pred_check
      _
    $region39: #{net_forward.1} parent=1 // pred_check_branch
      %75 = sbr.rel (0) target = $region41
    $region40: #{net_forward.1} parent=1 // pred_region
      %76 = dma.done [#allocation6], 1024
    $region41: #{net_forward.1} parent=1 // pred_fallthru
      _
    // Predicated region
    $region42: #{net_forward.1} parent=1 // pred_check
      _
    $region43: #{net_forward.1} parent=1 // pred_check_branch
      %78 = sbr.rel (0) target = $region45
    $region44: #{net_forward.1} parent=1 // pred_region
      %79 = dma.done [#allocation9], 1024
    $region45: #{net_forward.1} parent=1 // pred_fallthru
      _
    %v80 = vld [vmem:[#allocation2] sm:$0xff]
    %v81 = vld [vmem:[#allocation5] sm:$0xff]
    %v82 = vld [vmem:[#allocation5 + $0x8] sm:$0xff]
    %v83 = vld [vmem:[#allocation5 + $0x10] sm:$0xff]
    %v84 = vld [vmem:[#allocation5 + $0x18] sm:$0xff]
    %v85 = vld [vmem:[%s2] sm:$0x1]
    %v87 = vlaneseq
    %v88 = vshrl.u32 %v87, 7
    %v89 = vsub.s32 0, %v88
    %v90 = vrot.slane %v85, %v89
    %vm92 = vcmask 261120
    %v94 = vsel %vm92, %v80, 0
    %96 = vmatprep.subr.mxu0 0.0
    %97 = vmatpush1.msra.mxu0 %v81
    %98 = vmatprep.subr.mxu0 0.0
    %99 = vmatpush1.msra.mxu0 %v82
    %100 = vmatprep.subr.mxu0 0.0
    %101 = vmatpush1.msra.mxu0 %v83
    %102 = vmatprep.subr.mxu0 0.0
    %103 = vmatpush1.msra.mxu0 %v84
    %104 = vmatprep.subr.mxu0 0.0
    %105 = vmatpush1.msra.mxu0 0.0
    %106 = vmatprep.subr.mxu0 0.0
    %107 = vmatpush1.msra.mxu0 0.0
    %108 = vmatprep.subr.mxu0 0.0
    %109 = vmatpush1.msra.mxu0 0.0
    %110 = vmatprep.subr.mxu0 0.0
    %111 = vmatpush1.msra.mxu0 0.0
    %112 = vmatprep.subr.mxu0 0.0
    %113 = vmatpush1.msra.mxu0 0.0
    %114 = vmatprep.subr.mxu0 0.0
    %115 = vmatpush1.msra.mxu0 0.0
    %116 = vmatprep.subr.mxu0 0.0
    %117 = vmatpush1.msra.mxu0 0.0
    %118 = vmatprep.subr.mxu0 0.0
    %119 = vmatpush1.msra.mxu0 0.0
    %120 = vmatprep.subr.mxu0 0.0
    %121 = vmatpush1.msra.mxu0 0.0
    %122 = vmatprep.subr.mxu0 0.0
    %123 = vmatpush1.msra.mxu0 0.0
    %124 = vmatprep.subr.mxu0 0.0
    %125 = vmatpush1.msra.mxu0 0.0
    %126 = vmatprep.subr.mxu0 0.0
    %127 = vmatpush1.msra.mxu0 0.0
    %128 = vmatprep.subr.mxu0 0.0
    %129 = vmatpush1.msra.mxu0 0.0
    %130 = vmatprep.subr.mxu0 0.0
    %131 = vmatpush1.msra.mxu0 0.0
    %132 = vmatprep.subr.mxu0 0.0
    %133 = vmatpush1.msra.mxu0 0.0
    %134 = vmatprep.subr.mxu0 0.0
    %135 = vmatpush1.msra.mxu0 0.0
    %136 = vmatprep.subr.mxu0 0.0
    %137 = vmatpush1.msra.mxu0 0.0
    %138 = vmatprep.subr.mxu0 0.0
    %139 = vmatpush1.msra.mxu0 0.0
    %140 = vmatprep.subr.mxu0 0.0
    %141 = vmatpush1.msra.mxu0 0.0
    %142 = vmatprep.subr.mxu0 0.0
    %143 = vmatpush1.msra.mxu0 0.0
    %144 = vmatprep.subr.mxu0 0.0
    %145 = vmatpush1.msra.mxu0 0.0
    %146 = vmatprep.subr.mxu0 0.0
    %147 = vmatpush1.msra.mxu0 0.0
    %148 = vmatprep.subr.mxu0 0.0
    %149 = vmatpush1.msra.mxu0 0.0
    %150 = vmatprep.subr.mxu0 0.0
    %151 = vmatpush1.msra.mxu0 0.0
    %152 = vmatprep.subr.mxu0 0.0
    %153 = vmatpush1.msra.mxu0 0.0
    %154 = vmatprep.subr.mxu0 0.0
    %155 = vmatpush1.msra.mxu0 0.0
    %156 = vmatprep.subr.mxu0 0.0
    %157 = vmatpush1.msra.mxu0 0.0
    %158 = vmatprep.subr.mxu0 0.0
    %159 = vmatpush1.msra.mxu0 0.0
    %160 = vmatprep.mubr.f32.mxu0 0.0
    %161 = vmatmul.mubr.f32.gmra.mrb[0].mxu0 %v94
    %v162 = vpop.f32.mrb[0].mxu0
    %v163 = vadd.f32 %v90, %v162
    %v164 = vpop.f32.mrb[0].mxu0
    %165 = vdwg.mxu0
    %v166 = vmax.f32 %v163, 0.0
    %v167 = vld [vmem:[#allocation7] sm:$0xff]
    %v168 = vld [vmem:[#allocation7 + $0x8] sm:$0xff]
    %v169 = vld [vmem:[#allocation7 + $0x10] sm:$0xff]
    %v170 = vld [vmem:[#allocation7 + $0x18] sm:$0xff]
    %v171 = vld [vmem:[#allocation7 + $0x20] sm:$0xff]
    %v172 = vld [vmem:[#allocation7 + $0x28] sm:$0xff]
    %v173 = vld [vmem:[#allocation7 + $0x30] sm:$0xff]
    %v174 = vld [vmem:[#allocation7 + $0x38] sm:$0xff]
    %v175 = vld [vmem:[%s4] sm:$0x1]
    %v177 = vlaneseq
    %v178 = vshrl.u32 %v177, 7
    %v179 = vsub.s32 0, %v178
    %v180 = vrot.slane %v175, %v179
    %vm182 = vcmask 523264
    %v184 = vsel %vm182, %v166, 0
    %186 = vmatprep.subr.mxu0 0.0
    %187 = vmatpush1.msra.mxu0 %v167
    %188 = vmatprep.subr.mxu0 0.0
    %189 = vmatpush1.msra.mxu0 %v168
    %190 = vmatprep.subr.mxu0 0.0
    %191 = vmatpush1.msra.mxu0 %v169
    %192 = vmatprep.subr.mxu0 0.0
    %193 = vmatpush1.msra.mxu0 %v170
    %194 = vmatprep.subr.mxu0 0.0
    %195 = vmatpush1.msra.mxu0 %v171
    %196 = vmatprep.subr.mxu0 0.0
    %197 = vmatpush1.msra.mxu0 %v172
    %198 = vmatprep.subr.mxu0 0.0
    %199 = vmatpush1.msra.mxu0 %v173
    %200 = vmatprep.subr.mxu0 0.0
    %201 = vmatpush1.msra.mxu0 %v174
    %202 = vmatprep.subr.mxu0 0.0
    %203 = vmatpush1.msra.mxu0 0.0
    %204 = vmatprep.subr.mxu0 0.0
    %205 = vmatpush1.msra.mxu0 0.0
    %206 = vmatprep.subr.mxu0 0.0
    %207 = vmatpush1.msra.mxu0 0.0
    %208 = vmatprep.subr.mxu0 0.0
    %209 = vmatpush1.msra.mxu0 0.0
    %210 = vmatprep.subr.mxu0 0.0
    %211 = vmatpush1.msra.mxu0 0.0
    %212 = vmatprep.subr.mxu0 0.0
    %213 = vmatpush1.msra.mxu0 0.0
    %214 = vmatprep.subr.mxu0 0.0
    %215 = vmatpush1.msra.mxu0 0.0
    %216 = vmatprep.subr.mxu0 0.0
    %217 = vmatpush1.msra.mxu0 0.0
    %218 = vmatprep.subr.mxu0 0.0
    %219 = vmatpush1.msra.mxu0 0.0
    %220 = vmatprep.subr.mxu0 0.0
    %221 = vmatpush1.msra.mxu0 0.0
    %222 = vmatprep.subr.mxu0 0.0
    %223 = vmatpush1.msra.mxu0 0.0
    %224 = vmatprep.subr.mxu0 0.0
    %225 = vmatpush1.msra.mxu0 0.0
    %226 = vmatprep.subr.mxu0 0.0
    %227 = vmatpush1.msra.mxu0 0.0
    %228 = vmatprep.subr.mxu0 0.0
    %229 = vmatpush1.msra.mxu0 0.0
    %230 = vmatprep.subr.mxu0 0.0
    %231 = vmatpush1.msra.mxu0 0.0
    %232 = vmatprep.subr.mxu0 0.0
    %233 = vmatpush1.msra.mxu0 0.0
    %234 = vmatprep.subr.mxu0 0.0
    %235 = vmatpush1.msra.mxu0 0.0
    %236 = vmatprep.subr.mxu0 0.0
    %237 = vmatpush1.msra.mxu0 0.0
    %238 = vmatprep.subr.mxu0 0.0
    %239 = vmatpush1.msra.mxu0 0.0
    %240 = vmatprep.subr.mxu0 0.0
    %241 = vmatpush1.msra.mxu0 0.0
    %242 = vmatprep.subr.mxu0 0.0
    %243 = vmatpush1.msra.mxu0 0.0
    %244 = vmatprep.subr.mxu0 0.0
    %245 = vmatpush1.msra.mxu0 0.0
    %246 = vmatprep.subr.mxu0 0.0
    %247 = vmatpush1.msra.mxu0 0.0
    %248 = vmatprep.subr.mxu0 0.0
    %249 = vmatpush1.msra.mxu0 0.0
    %250 = vmatprep.mubr.f32.mxu0 0.0
    %251 = vmatmul.mubr.f32.gmra.mrb[0].mxu0 %v184
    %v252 = vpop.f32.mrb[0].mxu0
    %v253 = vadd.f32 %v180, %v252
    %v254 = vpop.f32.mrb[0].mxu0
    %255 = vdwg.mxu0
    %v256 = vmax.f32 %v253, 0.0
    %v257 = vld [vmem:[#allocation8] sm:$0xff]
    %v258 = vld [vmem:[#allocation8 + $0x8] sm:$0xff]
    %v259 = vld [vmem:[#allocation8 + $0x10] sm:$0xff]
    %v260 = vld [vmem:[#allocation8 + $0x18] sm:$0xff]
    %v261 = vld [vmem:[#allocation8 + $0x20] sm:$0xff]
    %v262 = vld [vmem:[#allocation8 + $0x28] sm:$0xff]
    %v263 = vld [vmem:[#allocation8 + $0x30] sm:$0xff]
    %v264 = vld [vmem:[#allocation8 + $0x38] sm:$0xff]
    %v265 = vld [vmem:[%s6] sm:$0x1]
    %v267 = vlaneseq
    %v268 = vshrl.u32 %v267, 7
    %v269 = vsub.s32 0, %v268
    %v270 = vrot.slane %v265, %v269
    %v273 = vsel %vm182, %v256, 0
    %275 = vmatprep.subr.mxu0 0.0
    %276 = vmatpush1.msra.mxu0 %v257
    %277 = vmatprep.subr.mxu0 0.0
    %278 = vmatpush1.msra.mxu0 %v258
    %279 = vmatprep.subr.mxu0 0.0
    %280 = vmatpush1.msra.mxu0 %v259
    %281 = vmatprep.subr.mxu0 0.0
    %282 = vmatpush1.msra.mxu0 %v260
    %283 = vmatprep.subr.mxu0 0.0
    %284 = vmatpush1.msra.mxu0 %v261
    %285 = vmatprep.subr.mxu0 0.0
    %286 = vmatpush1.msra.mxu0 %v262
    %287 = vmatprep.subr.mxu0 0.0
    %288 = vmatpush1.msra.mxu0 %v263
    %289 = vmatprep.subr.mxu0 0.0
    %290 = vmatpush1.msra.mxu0 %v264
    %291 = vmatprep.subr.mxu0 0.0
    %292 = vmatpush1.msra.mxu0 0.0
    %293 = vmatprep.subr.mxu0 0.0
    %294 = vmatpush1.msra.mxu0 0.0
    %295 = vmatprep.subr.mxu0 0.0
    %296 = vmatpush1.msra.mxu0 0.0
    %297 = vmatprep.subr.mxu0 0.0
    %298 = vmatpush1.msra.mxu0 0.0
    %299 = vmatprep.subr.mxu0 0.0
    %300 = vmatpush1.msra.mxu0 0.0
    %301 = vmatprep.subr.mxu0 0.0
    %302 = vmatpush1.msra.mxu0 0.0
    %303 = vmatprep.subr.mxu0 0.0
    %304 = vmatpush1.msra.mxu0 0.0
    %305 = vmatprep.subr.mxu0 0.0
    %306 = vmatpush1.msra.mxu0 0.0
    %307 = vmatprep.subr.mxu0 0.0
    %308 = vmatpush1.msra.mxu0 0.0
    %309 = vmatprep.subr.mxu0 0.0
    %310 = vmatpush1.msra.mxu0 0.0
    %311 = vmatprep.subr.mxu0 0.0
    %312 = vmatpush1.msra.mxu0 0.0
    %313 = vmatprep.subr.mxu0 0.0
    %314 = vmatpush1.msra.mxu0 0.0
    %315 = vmatprep.subr.mxu0 0.0
    %316 = vmatpush1.msra.mxu0 0.0
    %317 = vmatprep.subr.mxu0 0.0
    %318 = vmatpush1.msra.mxu0 0.0
    %319 = vmatprep.subr.mxu0 0.0
    %320 = vmatpush1.msra.mxu0 0.0
    %321 = vmatprep.subr.mxu0 0.0
    %322 = vmatpush1.msra.mxu0 0.0
    %323 = vmatprep.subr.mxu0 0.0
    %324 = vmatpush1.msra.mxu0 0.0
    %325 = vmatprep.subr.mxu0 0.0
    %326 = vmatpush1.msra.mxu0 0.0
    %327 = vmatprep.subr.mxu0 0.0
    %328 = vmatpush1.msra.mxu0 0.0
    %329 = vmatprep.subr.mxu0 0.0
    %330 = vmatpush1.msra.mxu0 0.0
    %331 = vmatprep.subr.mxu0 0.0
    %332 = vmatpush1.msra.mxu0 0.0
    %333 = vmatprep.subr.mxu0 0.0
    %334 = vmatpush1.msra.mxu0 0.0
    %335 = vmatprep.subr.mxu0 0.0
    %336 = vmatpush1.msra.mxu0 0.0
    %337 = vmatprep.subr.mxu0 0.0
    %338 = vmatpush1.msra.mxu0 0.0
    %339 = vmatprep.mubr.f32.mxu0 0.0
    %340 = vmatmul.mubr.f32.gmra.mrb[0].mxu0 %v273
    %v341 = vpop.f32.mrb[0].mxu0
    %v342 = vadd.f32 %v270, %v341
    %v343 = vpop.f32.mrb[0].mxu0
    %344 = vdwg.mxu0
    %345 = vst [vmem:[#allocation10] sm:$0xff] %v342
    // Predicated region
    $region46: #{net_forward.1} parent=1 // pred_check
      _
    $region47: #{net_forward.1} parent=1 // pred_check_branch
      %347 = sbr.rel (0) target = $region49
    $region48: #{net_forward.1} parent=1 // pred_region
      %s349 = ssub.s32 128, 128
      %350 = vsyncadd [#allocation4], %s349
      %s352 = sshll.u32 [#allocation10], 4
      %s353 = int_to_ptr.vmem [resolvable:$true] %s352
      %355 = dma.vmem_to_hbm [thread:$0]  %s353, 128, %s7, [#allocation4]
    $region49: #{net_forward.1} parent=1 // pred_fallthru
      _
    // Predicated region
    $region50: #{net_forward.1} parent=1 // pred_check
      _
    $region51: #{net_forward.1} parent=1 // pred_check_branch
      %357 = sbr.rel (0) target = $region53
    $region52: #{net_forward.1} parent=1 // pred_region
      %358 = dma.done [#allocation4], 128
    $region53: #{net_forward.1} parent=1 // pred_fallthru
      _
    %359 = vsyncpa [#allocation3], 1
    %360 = vsyncpa [#allocation6], 1
    %361 = vsyncpa [#allocation9], 1
    %362 = vsyncpa [#allocation4], 1

</llo_original>
